<compile_context>
chip_gen: v7x
topology: tpu7x:2x2x1
jax: 0.10.0
libtpu: 0.0.40
codegen_flags: <defaults>
</compile_context>

<pallas_src>
import jax
import jax.numpy as jnp
from jax import lax
from jax.experimental import pallas as pl
from jax.experimental.pallas import tpu as pltpu

EPS = 1e-7            # matches dice_loss(..., eps=1e-07) default in the reference
LANE = 128
MAX_ROWS_PER_TILE = 512   # 512 * 128 = 65536 pixels per hw tile


def _make_dice_kernel(num_classes, t_rows, n_inner, hw, need_mask):
    full_vreg = (t_rows % 8 == 0)   # tiny-image fallback when the single tile < 8 rows

    def kernel(t_ref, x_ref, inter_ref, card_ref):
        @pl.when(pl.program_id(2) == 0)
        def _():
            inter_ref[...] = jnp.zeros_like(inter_ref)
            card_ref[...] = jnp.zeros_like(card_ref)

        tgt = t_ref[0].astype(jnp.int32)                          # (t_rows, 128)

        # Per-class logit planes, upcast to f32 (VPU/EUP math in f32 on all
        # gens, incl. v5e which has no bf16 VPU/EUP path).
        logits = [x_ref[0, c].astype(jnp.float32) for c in range(num_classes)]

        # Softmax over the statically-unrolled class axis.
        m = logits[0]
        for c in range(1, num_classes):
            m = jnp.maximum(m, logits[c])
        exps = [jnp.exp(l - m) for l in logits]
        denom = exps[0]
        for c in range(1, num_classes):
            denom = denom + exps[c]
        inv = pl.reciprocal(denom, approx=True)                   # EUP slot, ~free

        if need_mask:
            # Logical flat-pixel index of every element of this tile; tiles
            # (or tails of tiles) beyond H*W contribute exactly zero.  Garbage
            # values in the out-of-bounds part of an overhanging block are
            # discarded by the jnp.where select (NaN-safe).
            tile = pl.program_id(1) * n_inner + pl.program_id(2)
            row0 = tile * t_rows
            r_io = lax.broadcasted_iota(jnp.int32, (t_rows, LANE), 0)
            l_io = lax.broadcasted_iota(jnp.int32, (t_rows, LANE), 1)
            mask = (row0 + r_io) * LANE + l_io < hw
        else:
            mask = None

        for c in range(num_classes):
            p = exps[c] * inv                                     # (t_rows, 128) proba
            oh = (tgt == c).astype(jnp.float32)                   # (t_rows, 128) one-hot
            ic = p * oh
            cc = p + oh
            if mask is not None:
                ic = jnp.where(mask, ic, 0.0)
                cc = jnp.where(mask, cc, 0.0)
            if full_vreg:
                # reduce (t_rows,128) -> one vreg (8,128): pure vreg adds (VPU),
                # no XLU sublane reduce, no sub-vreg stores.
                inter_ref[0, 0, c] += ic.reshape(t_rows // 8, 8, LANE).sum(axis=0)
                card_ref[0, 0, c] += cc.reshape(t_rows // 8, 8, LANE).sum(axis=0)
            else:
                inter_ref[0, 0, c, 0:1, :] += jnp.sum(ic, axis=0, keepdims=True)
                card_ref[0, 0, c, 0:1, :] += jnp.sum(cc, axis=0, keepdims=True)

    return kernel


def dice_loss_pallas(pred, target):
    """pred: [B, C, H, W] logits (f32 or bf16); target: [B,1,H,W] / [B,H,W] ints."""
    B, C, H, W = pred.shape
    if C == 1:
        # TODO(synk): the num_classes == 1 (sigmoid) branch of dice_loss is not implemented.
        raise NotImplementedError("num_classes == 1 branch not implemented")
    HW = H * W

    # --- layout plumbing only (no dtype cast of logits; targets go int8) ---
    rows = -(-HW // LANE)
    pad = rows * LANE - HW

    tgt = target.reshape(B, HW).astype(jnp.int8)     # 1 B/pixel target stream
    logits = pred.reshape(B, C, HW)
    if pad:
        # Only when H*W is not a multiple of 128 (at most 127 extra pixels);
        # padded pixels are excluded in-kernel by the mask.
        logits = jnp.pad(logits, ((0, 0), (0, 0), (0, pad)))
        tgt = jnp.pad(tgt, ((0, 0), (0, pad)), constant_values=-1)
    logits = logits.reshape(B, C, rows, LANE)
    tgt = tgt.reshape(B, rows, LANE)

    t_rows = min(MAX_ROWS_PER_TILE, rows)
    n_real = -(-rows // t_rows)                      # real hw tiles
    n_outer = 2 if n_real >= 2 else 1                # megacore split of the hw axis
    n_inner = -(-n_real // n_outer)
    need_mask = (n_outer * n_inner * t_rows * LANE) != HW

    def row_block(o, i):
        # clamp ghost tiles (when n_real is odd) onto the last real tile; their
        # contribution is zeroed by the in-kernel mask.
        return jnp.minimum(o * n_inner + i, n_real - 1)

    inter, card = pl.pallas_call(
        _make_dice_kernel(C, t_rows, n_inner, HW, need_mask),
        out_shape=(
            jax.ShapeDtypeStruct((B, n_outer, C, 8, LANE), jnp.float32),
            jax.ShapeDtypeStruct((B, n_outer, C, 8, LANE), jnp.float32),
        ),
        grid_spec=pltpu.PrefetchScalarGridSpec(
            num_scalar_prefetch=0,
            grid=(B, n_outer, n_inner),
            in_specs=[
                pl.BlockSpec((1, t_rows, LANE),
                             lambda b, o, i: (b, row_block(o, i), 0)),
                pl.BlockSpec((1, C, t_rows, LANE),
                             lambda b, o, i: (b, 0, row_block(o, i), 0)),
            ],
            out_specs=(
                pl.BlockSpec((1, 1, C, 8, LANE), lambda b, o, i: (b, o, 0, 0, 0)),
                pl.BlockSpec((1, 1, C, 8, LANE), lambda b, o, i: (b, o, 0, 0, 0)),
            ),
        ),
        compiler_params=pltpu.CompilerParams(
            dimension_semantics=("parallel", "parallel", "arbitrary")),
    )(tgt, logits)

    # --- tiny JAX glue: cross-batch / cross-core / cross-vreg reduction + dice ---
    inter_c = jnp.sum(inter, axis=(0, 1, 3, 4))                   # (C,)
    card_c = jnp.sum(card, axis=(0, 1, 3, 4))                     # (C,)
    dice = 2.0 * inter_c / (card_c + EPS)
    return 1.0 - jnp.mean(dice)


class DiceLossPallas:
    """Mirror of the PyTorch DiceLoss module (ctor args unused, as in reference)."""

    def __init__(self, num_classes=5, lmbda=10, epsilon=1e-05):
        pass

    def __call__(self, pred, target, epoch=0):
        return dice_loss_pallas(pred, target)


def _reference_loss(pred, target_hw):
    """Pure-JAX reference (softmax dice), target_hw: [B, H, W] int."""
    C = pred.shape[1]
    probas = jax.nn.softmax(pred.astype(jnp.float32), axis=1)
    onehot = jax.nn.one_hot(target_hw, C, dtype=jnp.float32).transpose(0, 3, 1, 2)
    inter = jnp.sum(probas * onehot, axis=(0, 2, 3))
    card = jnp.sum(probas + onehot, axis=(0, 2, 3))
    return 1.0 - jnp.mean(2.0 * inter / (card + EPS))


if __name__ == "__main__":
    key = jax.random.PRNGKey(0)
    loss_fn = DiceLossPallas()

    # --- test 1: small module-consistent shapes (single tiny tile path) ---
    k1, k2, k3, k4 = jax.random.split(key, 4)
    B, C, H, W = 2, 4, 16, 16
    pred = jax.random.normal(k1, (B, C, H, W), dtype=jnp.float32)
    target = jax.random.randint(k2, (B, 1, H, W), 0, C, dtype=jnp.int32)

    loss = loss_fn(pred, target)
    jax.block_until_ready(loss)
    ref = _reference_loss(pred, target[:, 0])
    # tolerance widened slightly: pl.reciprocal(approx=True) in the softmax
    # normalization introduces ~1e-4-level relative error vs jax.nn.softmax.
    assert jnp.allclose(loss, ref, atol=2e-3, rtol=2e-3), (loss, ref)

    # --- test 2: exercises large-tile / megacore-split / ragged-mask paths ---
    B2, C2, H2, W2 = 1, 5, 300, 220       # H*W = 66000: lane pad + overhanging tile
    pred2 = jax.random.normal(k3, (B2, C2, H2, W2), dtype=jnp.float32)
    target2 = jax.random.randint(k4, (B2, H2, W2), 0, C2, dtype=jnp.int32)

    loss2 = loss_fn(pred2, target2)
    jax.block_until_ready(loss2)
    ref2 = _reference_loss(pred2, target2)
    assert jnp.allclose(loss2, ref2, atol=2e-3, rtol=2e-3), (loss2, ref2)

    print("KERNEL_OK")
</pallas_src>

<mosaic_0001>
module attributes {stable_mosaic.version = 11 : i64} {
  func.func @kernel(%arg0: i32, %arg1: i32, %arg2: i32, %arg3: memref<1x2x128xi8, #tpu.memory_space<vmem>>, %arg4: memref<1x4x2x128xf32, #tpu.memory_space<vmem>>, %arg5: memref<1x1x4x8x128xf32, #tpu.memory_space<vmem>>, %arg6: memref<1x1x4x8x128xf32, #tpu.memory_space<vmem>>) attributes {dimension_semantics = [#tpu.dimension_semantics<parallel>, #tpu.dimension_semantics<parallel>, #tpu.dimension_semantics<arbitrary>], iteration_bounds = array<i64: 2, 1, 1>, scalar_prefetch = 0 : i64, scratch_operands = 0 : i64, tpu.core_type = #tpu.core_type<tc>, window_params = [{transform_indices = @transform_0, window_bounds = array<i64: 1, 2, 128>}, {transform_indices = @transform_1, window_bounds = array<i64: 1, 4, 2, 128>}, {transform_indices = @transform_2, window_bounds = array<i64: 1, 1, 4, 8, 128>}, {transform_indices = @transform_3, window_bounds = array<i64: 1, 1, 4, 8, 128>}]} {
    %c0_i32 = arith.constant 0 : i32
    %0 = arith.cmpi eq, %arg2, %c0_i32 : i32
    %1 = arith.extui %0 : i1 to i32
    %c0_i32_0 = arith.constant 0 : i32
    %2 = arith.cmpi ne, %1, %c0_i32_0 : i32
    scf.if %2 {
      %cst_104 = arith.constant 0.000000e+00 : f32
      %121 = vector.broadcast %cst_104 : f32 to vector<1x1x4x8x128xf32>
      %c0_105 = arith.constant 0 : index
      %c0_106 = arith.constant 0 : index
      %c0_107 = arith.constant 0 : index
      %c0_108 = arith.constant 0 : index
      %c0_109 = arith.constant 0 : index
      %122 = vector.load %arg5[%c0_105, %c0_106, %c0_107, %c0_108, %c0_109] : memref<1x1x4x8x128xf32, #tpu.memory_space<vmem>>, vector<1x1x4x8x128xf32>
      tpu.vector_store %arg5[%c0_105, %c0_106, %c0_107, %c0_108, %c0_109], %121 {strides = array<i32>} : memref<1x1x4x8x128xf32, #tpu.memory_space<vmem>>, vector<1x1x4x8x128xf32>,
      %cst_110 = arith.constant 0.000000e+00 : f32
      %123 = vector.broadcast %cst_110 : f32 to vector<1x1x4x8x128xf32>
      %c0_111 = arith.constant 0 : index
      %c0_112 = arith.constant 0 : index
      %c0_113 = arith.constant 0 : index
      %c0_114 = arith.constant 0 : index
      %c0_115 = arith.constant 0 : index
      %124 = vector.load %arg6[%c0_111, %c0_112, %c0_113, %c0_114, %c0_115] : memref<1x1x4x8x128xf32, #tpu.memory_space<vmem>>, vector<1x1x4x8x128xf32>
      tpu.vector_store %arg6[%c0_111, %c0_112, %c0_113, %c0_114, %c0_115], %123 {strides = array<i32>} : memref<1x1x4x8x128xf32, #tpu.memory_space<vmem>>, vector<1x1x4x8x128xf32>,
    } else {
    }
    %c0 = arith.constant 0 : index
    %c0_1 = arith.constant 0 : index
    %c0_2 = arith.constant 0 : index
    %3 = vector.load %arg3[%c0, %c0_1, %c0_2] : memref<1x2x128xi8, #tpu.memory_space<vmem>>, vector<1x2x128xi8>
    %4 = vector.shape_cast %3 : vector<1x2x128xi8> to vector<2x128xi8>
    %5 = arith.extsi %4 : vector<2x128xi8> to vector<2x128xi32>
    %c0_3 = arith.constant 0 : index
    %c0_4 = arith.constant 0 : index
    %c0_5 = arith.constant 0 : index
    %c0_6 = arith.constant 0 : index
    %6 = vector.load %arg4[%c0_3, %c0_4, %c0_5, %c0_6] : memref<1x4x2x128xf32, #tpu.memory_space<vmem>>, vector<1x1x2x128xf32>
    %7 = vector.shape_cast %6 : vector<1x1x2x128xf32> to vector<2x128xf32>
    %c0_7 = arith.constant 0 : index
    %c1 = arith.constant 1 : index
    %c0_8 = arith.constant 0 : index
    %c0_9 = arith.constant 0 : index
    %8 = vector.load %arg4[%c0_7, %c1, %c0_8, %c0_9] : memref<1x4x2x128xf32, #tpu.memory_space<vmem>>, vector<1x1x2x128xf32>
    %9 = vector.shape_cast %8 : vector<1x1x2x128xf32> to vector<2x128xf32>
    %c0_10 = arith.constant 0 : index
    %c2 = arith.constant 2 : index
    %c0_11 = arith.constant 0 : index
    %c0_12 = arith.constant 0 : index
    %10 = vector.load %arg4[%c0_10, %c2, %c0_11, %c0_12] : memref<1x4x2x128xf32, #tpu.memory_space<vmem>>, vector<1x1x2x128xf32>
    %11 = vector.shape_cast %10 : vector<1x1x2x128xf32> to vector<2x128xf32>
    %c0_13 = arith.constant 0 : index
    %c3 = arith.constant 3 : index
    %c0_14 = arith.constant 0 : index
    %c0_15 = arith.constant 0 : index
    %12 = vector.load %arg4[%c0_13, %c3, %c0_14, %c0_15] : memref<1x4x2x128xf32, #tpu.memory_space<vmem>>, vector<1x1x2x128xf32>
    %13 = vector.shape_cast %12 : vector<1x1x2x128xf32> to vector<2x128xf32>
    %14 = arith.maximumf %7, %9 : vector<2x128xf32>
    %15 = arith.maximumf %14, %11 : vector<2x128xf32>
    %16 = arith.maximumf %15, %13 : vector<2x128xf32>
    %17 = arith.subf %7, %16 : vector<2x128xf32>
    %18 = math.exp %17 : vector<2x128xf32>
    %19 = arith.subf %9, %16 : vector<2x128xf32>
    %20 = math.exp %19 : vector<2x128xf32>
    %21 = arith.subf %11, %16 : vector<2x128xf32>
    %22 = math.exp %21 : vector<2x128xf32>
    %23 = arith.subf %13, %16 : vector<2x128xf32>
    %24 = math.exp %23 : vector<2x128xf32>
    %25 = arith.addf %18, %20 : vector<2x128xf32>
    %26 = arith.addf %25, %22 : vector<2x128xf32>
    %27 = arith.addf %26, %24 : vector<2x128xf32>
    %28 = tpu.reciprocal %27 {approx = true} : vector<2x128xf32> -> vector<2x128xf32>
    %29 = arith.mulf %18, %28 : vector<2x128xf32>
    %c0_i32_16 = arith.constant 0 : i32
    %30 = vector.broadcast %c0_i32_16 : i32 to vector<2x128xi32>
    %31 = arith.cmpi eq, %5, %30 : vector<2x128xi32>
    %32 = arith.extui %31 : vector<2x128xi1> to vector<2x128xi32>
    %33 = arith.sitofp %32 : vector<2x128xi32> to vector<2x128xf32>
    %34 = arith.mulf %29, %33 : vector<2x128xf32>
    %35 = arith.addf %29, %33 : vector<2x128xf32>
    %c0_17 = arith.constant 0 : index
    %c0_18 = arith.constant 0 : index
    %c0_19 = arith.constant 0 : index
    %c0_20 = arith.constant 0 : index
    %c0_21 = arith.constant 0 : index
    %36 = vector.load %arg5[%c0_17, %c0_18, %c0_19, %c0_20, %c0_21] : memref<1x1x4x8x128xf32, #tpu.memory_space<vmem>>, vector<1x1x1x1x128xf32>
    %37 = vector.shape_cast %36 : vector<1x1x1x1x128xf32> to vector<1x128xf32>
    %cst = arith.constant dense<0.000000e+00> : vector<128xf32>
    %38 = vector.multi_reduction <add>, %34, %cst [0] : vector<2x128xf32> to vector<128xf32>
    %39 = vector.shape_cast %38 : vector<128xf32> to vector<1x128xf32>
    %40 = arith.addf %37, %39 : vector<1x128xf32>
    %c0_22 = arith.constant 0 : index
    %c0_23 = arith.constant 0 : index
    %c0_24 = arith.constant 0 : index
    %c0_25 = arith.constant 0 : index
    %c0_26 = arith.constant 0 : index
    %41 = vector.load %arg5[%c0_22, %c0_23, %c0_24, %c0_25, %c0_26] : memref<1x1x4x8x128xf32, #tpu.memory_space<vmem>>, vector<1x1x1x1x128xf32>
    %42 = vector.shape_cast %41 : vector<1x1x1x1x128xf32> to vector<1x128xf32>
    %43 = vector.shape_cast %40 : vector<1x128xf32> to vector<1x1x1x1x128xf32>
    tpu.vector_store %arg5[%c0_22, %c0_23, %c0_24, %c0_25, %c0_26], %43 {strides = array<i32>} : memref<1x1x4x8x128xf32, #tpu.memory_space<vmem>>, vector<1x1x1x1x128xf32>,
    %c0_27 = arith.constant 0 : index
    %c0_28 = arith.constant 0 : index
    %c0_29 = arith.constant 0 : index
    %c0_30 = arith.constant 0 : index
    %c0_31 = arith.constant 0 : index
    %44 = vector.load %arg6[%c0_27, %c0_28, %c0_29, %c0_30, %c0_31] : memref<1x1x4x8x128xf32, #tpu.memory_space<vmem>>, vector<1x1x1x1x128xf32>
    %45 = vector.shape_cast %44 : vector<1x1x1x1x128xf32> to vector<1x128xf32>
    %cst_32 = arith.constant dense<0.000000e+00> : vector<128xf32>
    %46 = vector.multi_reduction <add>, %35, %cst_32 [0] : vector<2x128xf32> to vector<128xf32>
    %47 = vector.shape_cast %46 : vector<128xf32> to vector<1x128xf32>
    %48 = arith.addf %45, %47 : vector<1x128xf32>
    %c0_33 = arith.constant 0 : index
    %c0_34 = arith.constant 0 : index
    %c0_35 = arith.constant 0 : index
    %c0_36 = arith.constant 0 : index
    %c0_37 = arith.constant 0 : index
    %49 = vector.load %arg6[%c0_33, %c0_34, %c0_35, %c0_36, %c0_37] : memref<1x1x4x8x128xf32, #tpu.memory_space<vmem>>, vector<1x1x1x1x128xf32>
    %50 = vector.shape_cast %49 : vector<1x1x1x1x128xf32> to vector<1x128xf32>
    %51 = vector.shape_cast %48 : vector<1x128xf32> to vector<1x1x1x1x128xf32>
    tpu.vector_store %arg6[%c0_33, %c0_34, %c0_35, %c0_36, %c0_37], %51 {strides = array<i32>} : memref<1x1x4x8x128xf32, #tpu.memory_space<vmem>>, vector<1x1x1x1x128xf32>,
    %52 = arith.mulf %20, %28 : vector<2x128xf32>
    %c1_i32 = arith.constant 1 : i32
    %53 = vector.broadcast %c1_i32 : i32 to vector<2x128xi32>
    %54 = arith.cmpi eq, %5, %53 : vector<2x128xi32>
    %55 = arith.extui %54 : vector<2x128xi1> to vector<2x128xi32>
    %56 = arith.sitofp %55 : vector<2x128xi32> to vector<2x128xf32>
    %57 = arith.mulf %52, %56 : vector<2x128xf32>
    %58 = arith.addf %52, %56 : vector<2x128xf32>
    %c0_38 = arith.constant 0 : index
    %c0_39 = arith.constant 0 : index
    %c1_40 = arith.constant 1 : index
    %c0_41 = arith.constant 0 : index
    %c0_42 = arith.constant 0 : index
    %59 = vector.load %arg5[%c0_38, %c0_39, %c1_40, %c0_41, %c0_42] : memref<1x1x4x8x128xf32, #tpu.memory_space<vmem>>, vector<1x1x1x1x128xf32>
    %60 = vector.shape_cast %59 : vector<1x1x1x1x128xf32> to vector<1x128xf32>
    %cst_43 = arith.constant dense<0.000000e+00> : vector<128xf32>
    %61 = vector.multi_reduction <add>, %57, %cst_43 [0] : vector<2x128xf32> to vector<128xf32>
    %62 = vector.shape_cast %61 : vector<128xf32> to vector<1x128xf32>
    %63 = arith.addf %60, %62 : vector<1x128xf32>
    %c0_44 = arith.constant 0 : index
    %c0_45 = arith.constant 0 : index
    %c1_46 = arith.constant 1 : index
    %c0_47 = arith.constant 0 : index
    %c0_48 = arith.constant 0 : index
    %64 = vector.load %arg5[%c0_44, %c0_45, %c1_46, %c0_47, %c0_48] : memref<1x1x4x8x128xf32, #tpu.memory_space<vmem>>, vector<1x1x1x1x128xf32>
    %65 = vector.shape_cast %64 : vector<1x1x1x1x128xf32> to vector<1x128xf32>
    %66 = vector.shape_cast %63 : vector<1x128xf32> to vector<1x1x1x1x128xf32>
    tpu.vector_store %arg5[%c0_44, %c0_45, %c1_46, %c0_47, %c0_48], %66 {strides = array<i32>} : memref<1x1x4x8x128xf32, #tpu.memory_space<vmem>>, vector<1x1x1x1x128xf32>,
    %c0_49 = arith.constant 0 : index
    %c0_50 = arith.constant 0 : index
    %c1_51 = arith.constant 1 : index
    %c0_52 = arith.constant 0 : index
    %c0_53 = arith.constant 0 : index
    %67 = vector.load %arg6[%c0_49, %c0_50, %c1_51, %c0_52, %c0_53] : memref<1x1x4x8x128xf32, #tpu.memory_space<vmem>>, vector<1x1x1x1x128xf32>
    %68 = vector.shape_cast %67 : vector<1x1x1x1x128xf32> to vector<1x128xf32>
    %cst_54 = arith.constant dense<0.000000e+00> : vector<128xf32>
    %69 = vector.multi_reduction <add>, %58, %cst_54 [0] : vector<2x128xf32> to vector<128xf32>
    %70 = vector.shape_cast %69 : vector<128xf32> to vector<1x128xf32>
    %71 = arith.addf %68, %70 : vector<1x128xf32>
    %c0_55 = arith.constant 0 : index
    %c0_56 = arith.constant 0 : index
    %c1_57 = arith.constant 1 : index
    %c0_58 = arith.constant 0 : index
    %c0_59 = arith.constant 0 : index
    %72 = vector.load %arg6[%c0_55, %c0_56, %c1_57, %c0_58, %c0_59] : memref<1x1x4x8x128xf32, #tpu.memory_space<vmem>>, vector<1x1x1x1x128xf32>
    %73 = vector.shape_cast %72 : vector<1x1x1x1x128xf32> to vector<1x128xf32>
    %74 = vector.shape_cast %71 : vector<1x128xf32> to vector<1x1x1x1x128xf32>
    tpu.vector_store %arg6[%c0_55, %c0_56, %c1_57, %c0_58, %c0_59], %74 {strides = array<i32>} : memref<1x1x4x8x128xf32, #tpu.memory_space<vmem>>, vector<1x1x1x1x128xf32>,
    %75 = arith.mulf %22, %28 : vector<2x128xf32>
    %c2_i32 = arith.constant 2 : i32
    %76 = vector.broadcast %c2_i32 : i32 to vector<2x128xi32>
    %77 = arith.cmpi eq, %5, %76 : vector<2x128xi32>
    %78 = arith.extui %77 : vector<2x128xi1> to vector<2x128xi32>
    %79 = arith.sitofp %78 : vector<2x128xi32> to vector<2x128xf32>
    %80 = arith.mulf %75, %79 : vector<2x128xf32>
    %81 = arith.addf %75, %79 : vector<2x128xf32>
    %c0_60 = arith.constant 0 : index
    %c0_61 = arith.constant 0 : index
    %c2_62 = arith.constant 2 : index
    %c0_63 = arith.constant 0 : index
    %c0_64 = arith.constant 0 : index
    %82 = vector.load %arg5[%c0_60, %c0_61, %c2_62, %c0_63, %c0_64] : memref<1x1x4x8x128xf32, #tpu.memory_space<vmem>>, vector<1x1x1x1x128xf32>
    %83 = vector.shape_cast %82 : vector<1x1x1x1x128xf32> to vector<1x128xf32>
    %cst_65 = arith.constant dense<0.000000e+00> : vector<128xf32>
    %84 = vector.multi_reduction <add>, %80, %cst_65 [0] : vector<2x128xf32> to vector<128xf32>
    %85 = vector.shape_cast %84 : vector<128xf32> to vector<1x128xf32>
    %86 = arith.addf %83, %85 : vector<1x128xf32>
    %c0_66 = arith.constant 0 : index
    %c0_67 = arith.constant 0 : index
    %c2_68 = arith.constant 2 : index
    %c0_69 = arith.constant 0 : index
    %c0_70 = arith.constant 0 : index
    %87 = vector.load %arg5[%c0_66, %c0_67, %c2_68, %c0_69, %c0_70] : memref<1x1x4x8x128xf32, #tpu.memory_space<vmem>>, vector<1x1x1x1x128xf32>
    %88 = vector.shape_cast %87 : vector<1x1x1x1x128xf32> to vector<1x128xf32>
    %89 = vector.shape_cast %86 : vector<1x128xf32> to vector<1x1x1x1x128xf32>
    tpu.vector_store %arg5[%c0_66, %c0_67, %c2_68, %c0_69, %c0_70], %89 {strides = array<i32>} : memref<1x1x4x8x128xf32, #tpu.memory_space<vmem>>, vector<1x1x1x1x128xf32>,
    %c0_71 = arith.constant 0 : index
    %c0_72 = arith.constant 0 : index
    %c2_73 = arith.constant 2 : index
    %c0_74 = arith.constant 0 : index
    %c0_75 = arith.constant 0 : index
    %90 = vector.load %arg6[%c0_71, %c0_72, %c2_73, %c0_74, %c0_75] : memref<1x1x4x8x128xf32, #tpu.memory_space<vmem>>, vector<1x1x1x1x128xf32>
    %91 = vector.shape_cast %90 : vector<1x1x1x1x128xf32> to vector<1x128xf32>
    %cst_76 = arith.constant dense<0.000000e+00> : vector<128xf32>
    %92 = vector.multi_reduction <add>, %81, %cst_76 [0] : vector<2x128xf32> to vector<128xf32>
    %93 = vector.shape_cast %92 : vector<128xf32> to vector<1x128xf32>
    %94 = arith.addf %91, %93 : vector<1x128xf32>
    %c0_77 = arith.constant 0 : index
    %c0_78 = arith.constant 0 : index
    %c2_79 = arith.constant 2 : index
    %c0_80 = arith.constant 0 : index
    %c0_81 = arith.constant 0 : index
    %95 = vector.load %arg6[%c0_77, %c0_78, %c2_79, %c0_80, %c0_81] : memref<1x1x4x8x128xf32, #tpu.memory_space<vmem>>, vector<1x1x1x1x128xf32>
    %96 = vector.shape_cast %95 : vector<1x1x1x1x128xf32> to vector<1x128xf32>
    %97 = vector.shape_cast %94 : vector<1x128xf32> to vector<1x1x1x1x128xf32>
    tpu.vector_store %arg6[%c0_77, %c0_78, %c2_79, %c0_80, %c0_81], %97 {strides = array<i32>} : memref<1x1x4x8x128xf32, #tpu.memory_space<vmem>>, vector<1x1x1x1x128xf32>,
    %98 = arith.mulf %24, %28 : vector<2x128xf32>
    %c3_i32 = arith.constant 3 : i32
    %99 = vector.broadcast %c3_i32 : i32 to vector<2x128xi32>
    %100 = arith.cmpi eq, %5, %99 : vector<2x128xi32>
    %101 = arith.extui %100 : vector<2x128xi1> to vector<2x128xi32>
    %102 = arith.sitofp %101 : vector<2x128xi32> to vector<2x128xf32>
    %103 = arith.mulf %98, %102 : vector<2x128xf32>
    %104 = arith.addf %98, %102 : vector<2x128xf32>
    %c0_82 = arith.constant 0 : index
    %c0_83 = arith.constant 0 : index
    %c3_84 = arith.constant 3 : index
    %c0_85 = arith.constant 0 : index
    %c0_86 = arith.constant 0 : index
    %105 = vector.load %arg5[%c0_82, %c0_83, %c3_84, %c0_85, %c0_86] : memref<1x1x4x8x128xf32, #tpu.memory_space<vmem>>, vector<1x1x1x1x128xf32>
    %106 = vector.shape_cast %105 : vector<1x1x1x1x128xf32> to vector<1x128xf32>
    %cst_87 = arith.constant dense<0.000000e+00> : vector<128xf32>
    %107 = vector.multi_reduction <add>, %103, %cst_87 [0] : vector<2x128xf32> to vector<128xf32>
    %108 = vector.shape_cast %107 : vector<128xf32> to vector<1x128xf32>
    %109 = arith.addf %106, %108 : vector<1x128xf32>
    %c0_88 = arith.constant 0 : index
    %c0_89 = arith.constant 0 : index
    %c3_90 = arith.constant 3 : index
    %c0_91 = arith.constant 0 : index
    %c0_92 = arith.constant 0 : index
    %110 = vector.load %arg5[%c0_88, %c0_89, %c3_90, %c0_91, %c0_92] : memref<1x1x4x8x128xf32, #tpu.memory_space<vmem>>, vector<1x1x1x1x128xf32>
    %111 = vector.shape_cast %110 : vector<1x1x1x1x128xf32> to vector<1x128xf32>
    %112 = vector.shape_cast %109 : vector<1x128xf32> to vector<1x1x1x1x128xf32>
    tpu.vector_store %arg5[%c0_88, %c0_89, %c3_90, %c0_91, %c0_92], %112 {strides = array<i32>} : memref<1x1x4x8x128xf32, #tpu.memory_space<vmem>>, vector<1x1x1x1x128xf32>,
    %c0_93 = arith.constant 0 : index
    %c0_94 = arith.constant 0 : index
    %c3_95 = arith.constant 3 : index
    %c0_96 = arith.constant 0 : index
    %c0_97 = arith.constant 0 : index
    %113 = vector.load %arg6[%c0_93, %c0_94, %c3_95, %c0_96, %c0_97] : memref<1x1x4x8x128xf32, #tpu.memory_space<vmem>>, vector<1x1x1x1x128xf32>
    %114 = vector.shape_cast %113 : vector<1x1x1x1x128xf32> to vector<1x128xf32>
    %cst_98 = arith.constant dense<0.000000e+00> : vector<128xf32>
    %115 = vector.multi_reduction <add>, %104, %cst_98 [0] : vector<2x128xf32> to vector<128xf32>
    %116 = vector.shape_cast %115 : vector<128xf32> to vector<1x128xf32>
    %117 = arith.addf %114, %116 : vector<1x128xf32>
    %c0_99 = arith.constant 0 : index
    %c0_100 = arith.constant 0 : index
    %c3_101 = arith.constant 3 : index
    %c0_102 = arith.constant 0 : index
    %c0_103 = arith.constant 0 : index
    %118 = vector.load %arg6[%c0_99, %c0_100, %c3_101, %c0_102, %c0_103] : memref<1x1x4x8x128xf32, #tpu.memory_space<vmem>>, vector<1x1x1x1x128xf32>
    %119 = vector.shape_cast %118 : vector<1x1x1x1x128xf32> to vector<1x128xf32>
    %120 = vector.shape_cast %117 : vector<1x128xf32> to vector<1x1x1x1x128xf32>
    tpu.vector_store %arg6[%c0_99, %c0_100, %c3_101, %c0_102, %c0_103], %120 {strides = array<i32>} : memref<1x1x4x8x128xf32, #tpu.memory_space<vmem>>, vector<1x1x1x1x128xf32>,
    return
  }
  func.func @transform_0(%arg0: i32, %arg1: i32, %arg2: i32) -> (i32, i32, i32) {
    %c1_i32 = arith.constant 1 : i32
    %0 = arith.muli %arg1, %c1_i32 : i32
    %1 = arith.addi %0, %arg2 : i32
    %c0_i32 = arith.constant 0 : i32
    %2 = arith.minsi %1, %c0_i32 : i32
    %c0_i32_0 = arith.constant 0 : i32
    %c0_i32_1 = arith.constant 0 : i32
    return %arg0, %2, %c0_i32_0 : i32, i32, i32
  }
  func.func @transform_1(%arg0: i32, %arg1: i32, %arg2: i32) -> (i32, i32, i32, i32) {
    %c1_i32 = arith.constant 1 : i32
    %0 = arith.muli %arg1, %c1_i32 : i32
    %1 = arith.addi %0, %arg2 : i32
    %c0_i32 = arith.constant 0 : i32
    %2 = arith.minsi %1, %c0_i32 : i32
    %c0_i32_0 = arith.constant 0 : i32
    %c0_i32_1 = arith.constant 0 : i32
    %c0_i32_2 = arith.constant 0 : i32
    return %arg0, %c0_i32_0, %2, %c0_i32_1 : i32, i32, i32, i32
  }
  func.func @transform_2(%arg0: i32, %arg1: i32, %arg2: i32) -> (i32, i32, i32, i32, i32) {
    %c0_i32 = arith.constant 0 : i32
    %c0_i32_0 = arith.constant 0 : i32
    %c0_i32_1 = arith.constant 0 : i32
    %c0_i32_2 = arith.constant 0 : i32
    return %arg0, %arg1, %c0_i32, %c0_i32_0, %c0_i32_1 : i32, i32, i32, i32, i32
  }
  func.func @transform_3(%arg0: i32, %arg1: i32, %arg2: i32) -> (i32, i32, i32, i32, i32) {
    %c0_i32 = arith.constant 0 : i32
    %c0_i32_0 = arith.constant 0 : i32
    %c0_i32_1 = arith.constant 0 : i32
    %c0_i32_2 = arith.constant 0 : i32
    return %arg0, %arg1, %c0_i32, %c0_i32_0, %c0_i32_1 : i32, i32, i32, i32, i32
  }
}

</mosaic_0001>

<llo_original>
// kernel: tpu_custom_call.1
$region0: #{tpu_custom_call.1}
  #allocation0 [shape = 'u32[]', space=smem, size = 0x4, offset = 0x4, fixed_abs, tag = 'smem constant byte address 0x4 - core index']
  #allocation1 [shape = 'u32[144,128]{1,0:T(1,128)}', space=vmem, size = 0x12000, scoped, tag = 'internal scratch']
  %s0 = inlined_call_operand.hbm [shape: s8[2,2,128], index: 0, kind: input, shape index: {}]
  %s1 = inlined_call_operand.hbm [shape: f32[2,4,2,128], index: 1, kind: input, shape index: {}]
  %s2 = inlined_call_operand.hbm [shape: f32[2,1,4,8,128], index: 2, kind: output, shape index: {0}]
  %s3 = inlined_call_operand.hbm [shape: f32[2,1,4,8,128], index: 3, kind: output, shape index: {1}]
  %4 = xla_tuple %s2, %s3
  %s5 = sld [smem:[#allocation0]]
  $region61: #{tpu_custom_call.1} parent=0
    _
  %s7 = ssub.s32 1, %s5
  %s8 = scalar_select 0, %s7, %s5
  $region1: #{tpu_custom_call.1} parent=0
    #allocation2 [shape = 'u8[1024]{0}', space=vmem, size = 0x400, scoped, tag = 'input window, operand 0']
    #allocation3 [shape = 's32[2]{0}', space=sflag, size = 0x8, scoped, tag = 'scoped memory for tpu_custom_call.1']
    #allocation4 [shape = 's32[2]{0}', space=sflag, size = 0x8, scoped, tag = 'scoped memory for tpu_custom_call.1']
    #allocation5 [shape = 'u8[8192]{0}', space=vmem, size = 0x2000, scoped, tag = 'input window, operand 1']
    #allocation6 [shape = 's32[2]{0}', space=sflag, size = 0x8, scoped, tag = 'scoped memory for tpu_custom_call.1']
    #allocation7 [shape = 'u8[32768]{0}', space=vmem, size = 0x8000, scoped, tag = 'output window, operand 0']
    #allocation8 [shape = 'u8[32768]{0}', space=vmem, size = 0x8000, scoped, tag = 'output window, operand 1']
    #allocation9 [shape = 's32[2]{0}', space=sflag, size = 0x8, scoped, tag = 'scoped memory for tpu_custom_call.1']
    %9 = vsyncpa [#allocation3], 0
    %s10 = scalar_lea.sflag [#allocation3], 1
    %11 = vsyncpa %s10, 0
    %12 = vsyncpa [#allocation6], 0
    %s13 = scalar_lea.sflag [#allocation6], 1
    %14 = vsyncpa %s13, 0
    %15 = vsyncpa [#allocation4], 0
    %s16 = scalar_lea.sflag [#allocation4], 1
    %17 = vsyncpa %s16, 0
    %18 = vsyncpa [#allocation9], 0
    %s19 = scalar_lea.sflag [#allocation9], 1
    %20 = vsyncpa %s19, 0
    loop: start=0, step=1, limit=4
    $region2: #{tpu_custom_call.1} parent=1 // loop_pre_header
      _
    $region3: #{tpu_custom_call.1} parent=1 // loop_header
      %s22 = sphi 0, %s26
      %p23 = scmp.ge.s32.totalorder %s22, 4
      %s29 = sphi 0, %s48
      %s30 = sphi 0, %s44
      %s31 = sphi 0, %s40
      %s32 = sphi 0, %s29
      %s33 = sphi 0, %s30
      %s34 = sphi 0, %s31
      %s35 = sphi 0, %s32
      %s36 = sphi 0, %s33
      %s37 = sphi 0, %s34
      %s59 = sphi 0, %s61
      %s62 = sphi 0, %s59
      %s63 = sphi 0, %s62
      %s79 = sphi 0, %s63
      %s93 = sphi 0, %s95
      %s96 = sphi 0, %s93
      %s97 = sphi 0, %s96
      %s113 = sphi 0, %s97
      %s121 = sphi 0, %s123
      %s124 = sphi 0, %s121
      %s125 = sphi 0, %s124
      %s141 = sphi 0, %s125
      %s149 = sphi 0, %s151
      %s152 = sphi 0, %s149
      %s153 = sphi 0, %s152
      %s169 = sphi 0, %s153
    $region4: #{tpu_custom_call.1} parent=1 // loop_header_branch
      %25 = sbr.rel (%p23) target = $region8
    $region5: #{tpu_custom_call.1} parent=1 // loop_body
      %s27 = ssub.s32 %s22, 1
      %s28 = ssub.s32 %s22, 2
      %s38 = sadd.s32 1, %s31
      %p39 = scmp.ge.s32.totalorder %s38, 1
      %s40 = scalar_select %p39, 0, %s38
      %s41 = sadd.s32 1, %s30
      %s42 = scalar_select %p39, %s41, %s30
      %p43 = scmp.ge.s32.totalorder %s42, 1
      %s44 = scalar_select %p43, 0, %s42
      %s45 = sadd.s32 1, %s29
      %s46 = scalar_select %p43, %s45, %s29
      %p47 = scmp.ge.s32.totalorder %s46, 2
      %s48 = scalar_select %p47, 0, %s46
      %s49 = sadd.s32 %s30, %s31
      %p50 = scmp.lt.s32.totalorder %s49, 0
      %s51 = scalar_select %p50, %s49, 0
      %s52 = sadd.s32 %s44, %s40
      %p53 = scmp.lt.s32.totalorder %s52, 0
      %s54 = scalar_select %p53, %s52, 0
      %s55 = ssub.s32 %s29, %s48
      %s56 = ssub.s32 %s51, %s54
      %s57 = sor.u32 %s55, %s56
      %p58 = scmp.eq.s32.totalorder %s57, 0
      %s60 = sadd.s32 %s59, 1
      %s61 = scalar_select %p58, %s59, %s60
      %p64 = pneg %p58
      %p65 = scmp.eq.s32.totalorder %s22, 1
      %p66 = por %p64, %p65
      %p67 = scmp.ne.s32.totalorder %s59, %s62
      %p68 = scmp.eq.s32.totalorder %s22, 0
      %p69 = por %p67, %p68
      %p70 = scmp.ne.s32.totalorder %s59, %s62
      %p71 = scmp.eq.s32.totalorder %s27, 1
      %p72 = por %p70, %p71
      %p73 = scmp.ne.s32.totalorder %s62, %s63
      %p74 = scmp.eq.s32.totalorder %s27, 0
      %p75 = por %p73, %p74
      %p76 = scmp.ne.s32.totalorder %s62, %s63
      %p77 = scmp.eq.s32.totalorder %s28, 1
      %p78 = por %p76, %p77
      %p80 = scmp.ne.s32.totalorder %s63, %s79
      %p81 = scmp.eq.s32.totalorder %s28, 0
      %p82 = por %p80, %p81
      %s83 = sadd.s32 %s30, %s31
      %p84 = scmp.lt.s32.totalorder %s83, 0
      %s85 = scalar_select %p84, %s83, 0
      %s86 = sadd.s32 %s44, %s40
      %p87 = scmp.lt.s32.totalorder %s86, 0
      %s88 = scalar_select %p87, %s86, 0
      %s89 = ssub.s32 %s29, %s48
      %s90 = ssub.s32 %s85, %s88
      %s91 = sor.u32 %s89, %s90
      %p92 = scmp.eq.s32.totalorder %s91, 0
      %s94 = sadd.s32 %s93, 1
      %s95 = scalar_select %p92, %s93, %s94
      %p98 = pneg %p92
      %p99 = scmp.eq.s32.totalorder %s22, 1
      %p100 = por %p98, %p99
      %p101 = scmp.ne.s32.totalorder %s93, %s96
      %p102 = scmp.eq.s32.totalorder %s22, 0
      %p103 = por %p101, %p102
      %p104 = scmp.ne.s32.totalorder %s93, %s96
      %p105 = scmp.eq.s32.totalorder %s27, 1
      %p106 = por %p104, %p105
      %p107 = scmp.ne.s32.totalorder %s96, %s97
      %p108 = scmp.eq.s32.totalorder %s27, 0
      %p109 = por %p107, %p108
      %p110 = scmp.ne.s32.totalorder %s96, %s97
      %p111 = scmp.eq.s32.totalorder %s28, 1
      %p112 = por %p110, %p111
      %p114 = scmp.ne.s32.totalorder %s97, %s113
      %p115 = scmp.eq.s32.totalorder %s28, 0
      %p116 = por %p114, %p115
      %s117 = ssub.s32 %s29, %s48
      %s118 = ssub.s32 %s30, %s44
      %s119 = sor.u32 %s117, %s118
      %p120 = scmp.eq.s32.totalorder %s119, 0
      %s122 = sadd.s32 %s121, 1
      %s123 = scalar_select %p120, %s121, %s122
      %p126 = pneg %p120
      %p127 = scmp.eq.s32.totalorder %s22, 1
      %p128 = por %p126, %p127
      %p129 = scmp.ne.s32.totalorder %s121, %s124
      %p130 = scmp.eq.s32.totalorder %s22, 0
      %p131 = por %p129, %p130
      %p132 = scmp.ne.s32.totalorder %s121, %s124
      %p133 = scmp.eq.s32.totalorder %s27, 1
      %p134 = por %p132, %p133
      %p135 = scmp.ne.s32.totalorder %s124, %s125
      %p136 = scmp.eq.s32.totalorder %s27, 0
      %p137 = por %p135, %p136
      %p138 = scmp.ne.s32.totalorder %s124, %s125
      %p139 = scmp.eq.s32.totalorder %s28, 1
      %p140 = por %p138, %p139
      %p142 = scmp.ne.s32.totalorder %s125, %s141
      %p143 = scmp.eq.s32.totalorder %s28, 0
      %p144 = por %p142, %p143
      %s145 = ssub.s32 %s29, %s48
      %s146 = ssub.s32 %s30, %s44
      %s147 = sor.u32 %s145, %s146
      %p148 = scmp.eq.s32.totalorder %s147, 0
      %s150 = sadd.s32 %s149, 1
      %s151 = scalar_select %p148, %s149, %s150
      %p154 = pneg %p148
      %p155 = scmp.eq.s32.totalorder %s22, 1
      %p156 = por %p154, %p155
      %p157 = scmp.ne.s32.totalorder %s149, %s152
      %p158 = scmp.eq.s32.totalorder %s22, 0
      %p159 = por %p157, %p158
      %p160 = scmp.ne.s32.totalorder %s149, %s152
      %p161 = scmp.eq.s32.totalorder %s27, 1
      %p162 = por %p160, %p161
      %p163 = scmp.ne.s32.totalorder %s152, %s153
      %p164 = scmp.eq.s32.totalorder %s27, 0
      %p165 = por %p163, %p164
      %p166 = scmp.ne.s32.totalorder %s152, %s153
      %p167 = scmp.eq.s32.totalorder %s28, 1
      %p168 = por %p166, %p167
      %p170 = scmp.ne.s32.totalorder %s153, %s169
      %p171 = scmp.eq.s32.totalorder %s28, 0
      %p172 = por %p170, %p171
      %p173 = scmp.le.s32.totalorder 1, %s22
      %p174 = scmp.lt.s32.totalorder %s22, 3
      %p175 = pnand %p173, %p174
      %p176 = pneg %p175
      // Predicated region
      $region9: #{tpu_custom_call.1} parent=5 // pred_check
        _
      $region10: #{tpu_custom_call.1} parent=5 // pred_check_branch
        %178 = sbr.rel (%p175) target = $region12
      $region11: #{tpu_custom_call.1} parent=5 // pred_region
        %s179 = ssub.s32 %s22, 1
      $region12: #{tpu_custom_call.1} parent=5 // pred_fallthru
        _
      %p180 = scmp.lt.s32.totalorder %s22, 2
      // Predicated region
      $region13: #{tpu_custom_call.1} parent=5 // pred_check
        %p181 = pneg %p180
      $region14: #{tpu_custom_call.1} parent=5 // pred_check_branch
        %183 = sbr.rel (%p181) target = $region16
      $region15: #{tpu_custom_call.1} parent=5 // pred_region
        // Predicated region
        $region17: #{tpu_custom_call.1} parent=15 // pred_check
          %p184 = pneg %p69
        $region18: #{tpu_custom_call.1} parent=15 // pred_check_branch
          %186 = sbr.rel (%p184) target = $region20
        $region19: #{tpu_custom_call.1} parent=15 // pred_region
          %s187 = sand.u32 %s59, 1
          %s188 = scalar_lea.sflag [#allocation3], %s187
          %s189 = sand.u32 %s59, 1
          %s190 = scalar_lea.vmem [#allocation2], %s189
          %s191 = sadd.s32 %s30, %s31
          %p192 = scmp.lt.s32.totalorder %s191, 0
          %s193 = scalar_select %p192, %s191, 0
          %s195 = ssub.s32 16, 16
          %196 = vsyncadd %s188, %s195
          %s197 = sadd.s32 %s193, %s29
          %s198 = smul.addr %s197, 16
          %s199 = scalar_lea.hbm %s0, %s198
          %s201 = sshll.u32 %s190, 4
          %s202 = int_to_ptr.vmem [resolvable:$true] %s201
          %204 = dma.hbm_to_vmem [thread:$0]  %s199, 16, %s202, %s188
        $region20: #{tpu_custom_call.1} parent=15 // pred_fallthru
          _
        // Predicated region
        $region21: #{tpu_custom_call.1} parent=15 // pred_check
          %p205 = pneg %p103
        $region22: #{tpu_custom_call.1} parent=15 // pred_check_branch
          %207 = sbr.rel (%p205) target = $region24
        $region23: #{tpu_custom_call.1} parent=15 // pred_region
          %s208 = sand.u32 %s93, 1
          %s209 = scalar_lea.sflag [#allocation6], %s208
          %s210 = sand.u32 %s93, 1
          %s211 = smul.addr %s210, 8
          %s212 = scalar_lea.vmem [#allocation5], %s211
          %s213 = sadd.s32 %s30, %s31
          %p214 = scmp.lt.s32.totalorder %s213, 0
          %s215 = scalar_select %p214, %s213, 0
          %s217 = ssub.s32 128, 128
          %218 = vsyncadd %s209, %s217
          %s219 = smul.addr %s29, 4
          %s220 = sadd.s32 %s215, %s219
          %s221 = smul.addr %s220, 32
          %s222 = scalar_lea.hbm %s1, %s221
          %s223 = sshll.u32 %s212, 4
          %s224 = int_to_ptr.vmem [resolvable:$true] %s223
          %229 = dma.hbm_to_vmem [thread:$0]  %s222, 128, %s224, %s209, 32, 32, 2
        $region24: #{tpu_custom_call.1} parent=15 // pred_fallthru
          _
      $region16: #{tpu_custom_call.1} parent=5 // pred_fallthru
        _
      %p230 = scmp.le.s32.totalorder 1, %s22
      %p231 = scmp.lt.s32.totalorder %s22, 3
      %p232 = pnand %p230, %p231
      %p233 = pneg %p232
      // Predicated region
      $region25: #{tpu_custom_call.1} parent=5 // pred_check
        _
      $region26: #{tpu_custom_call.1} parent=5 // pred_check_branch
        %235 = sbr.rel (%p232) target = $region28
      $region27: #{tpu_custom_call.1} parent=5 // pred_region
        %s236 = ssub.s32 %s22, 1
        %s237 = sand.u32 %s62, 1
        %s238 = scalar_lea.sflag [#allocation3], %s237
        %s239 = sand.u32 %s62, 1
        %s240 = scalar_lea.vmem [#allocation2], %s239
        // Predicated region
        $region29: #{tpu_custom_call.1} parent=27 // pred_check
          %p241 = pneg %p75
        $region30: #{tpu_custom_call.1} parent=27 // pred_check_branch
          %243 = sbr.rel (%p241) target = $region32
        $region31: #{tpu_custom_call.1} parent=27 // pred_region
          %244 = dma.done %s238, 16
        $region32: #{tpu_custom_call.1} parent=27 // pred_fallthru
          _
        %s245 = sand.u32 %s96, 1
        %s246 = scalar_lea.sflag [#allocation6], %s245
        %s247 = sand.u32 %s96, 1
        %s248 = smul.addr %s247, 8
        %s249 = scalar_lea.vmem [#allocation5], %s248
        // Predicated region
        $region33: #{tpu_custom_call.1} parent=27 // pred_check
          %p250 = pneg %p109
        $region34: #{tpu_custom_call.1} parent=27 // pred_check_branch
          %252 = sbr.rel (%p250) target = $region36
        $region35: #{tpu_custom_call.1} parent=27 // pred_region
          %253 = dma.done %s246, 128
        $region36: #{tpu_custom_call.1} parent=27 // pred_fallthru
          _
        %s254 = sand.u32 %s62, 1
        %s255 = scalar_lea.sflag [#allocation3], %s254
        %s256 = sand.u32 %s62, 1
        %s257 = scalar_lea.vmem [#allocation2], %s256
        %p258 = pneg %p75
        %p259 = pneg %p72
        %s260 = sand.u32 %s96, 1
        %s261 = scalar_lea.sflag [#allocation6], %s260
        %s262 = sand.u32 %s96, 1
        %s263 = smul.addr %s262, 8
        %s264 = scalar_lea.vmem [#allocation5], %s263
        %p265 = pneg %p109
        %p266 = pneg %p106
        %p267 = pneg %p137
        %p268 = pneg %p134
        %s269 = sand.u32 %s124, 1
        %s270 = scalar_lea.sflag [#allocation4], %s269
        %s271 = sand.u32 %s124, 1
        %s272 = smul.addr %s271, 32
        %s273 = scalar_lea.vmem [#allocation7], %s272
        %p274 = pneg %p165
        %p275 = pneg %p162
        %s276 = sand.u32 %s152, 1
        %s277 = scalar_lea.sflag [#allocation9], %s276
        %s278 = sand.u32 %s152, 1
        %s279 = smul.addr %s278, 32
        %s280 = scalar_lea.vmem [#allocation8], %s279
        %s281 = sadd.s32 %s33, %s34
        %p282 = scmp.lt.s32.totalorder %s281, 0
        %s283 = scalar_select %p282, %s281, 0
        %s284 = sadd.s32 %s33, %s34
        %p285 = scmp.lt.s32.totalorder %s284, 0
        %s286 = scalar_select %p285, %s284, 0
        %p287 = scmp.eq.s32.totalorder %s34, 0
        // Predicated region
        $region37: #{tpu_custom_call.1} parent=27 // pred_check
          %p288 = pneg %p287
        $region38: #{tpu_custom_call.1} parent=27 // pred_check_branch
          %290 = sbr.rel (%p288) target = $region40
        $region39: #{tpu_custom_call.1} parent=27 // pred_region
          %291 = vst [vmem:[%s273] sm:$0xff] 0.0
          %292 = vst [vmem:[%s273 + $0x8] sm:$0xff] 0.0
          %293 = vst [vmem:[%s273 + $0x10] sm:$0xff] 0.0
          %294 = vst [vmem:[%s273 + $0x18] sm:$0xff] 0.0
          %295 = vst [vmem:[%s280] sm:$0xff] 0.0
          %296 = vst [vmem:[%s280 + $0x8] sm:$0xff] 0.0
          %297 = vst [vmem:[%s280 + $0x10] sm:$0xff] 0.0
          %298 = vst [vmem:[%s280 + $0x18] sm:$0xff] 0.0
        $region40: #{tpu_custom_call.1} parent=27 // pred_fallthru
          _
        %v299 = vld [vmem:[%s240] sm:$0x1]
        %v300 = vunpack.c.0.s8 %v299
        %v301 = vld [vmem:[%s249] sm:$0x3]
        %s302 = scalar_lea.vmem %s249, 2 [#allocation5]
        %v303 = vld [vmem:[%s302] sm:$0x3]
        %s304 = scalar_lea.vmem %s249, 4 [#allocation5]
        %v305 = vld [vmem:[%s304] sm:$0x3]
        %s306 = scalar_lea.vmem %s249, 6 [#allocation5]
        %v307 = vld [vmem:[%s306] sm:$0x3]
        %v308 = vmax.f32 %v301, %v303
        %v309 = vmax.f32 %v308, %v305
        %v310 = vmax.f32 %v309, %v307
        %v311 = vsub.f32 %v301, %v310
        %v312 = vmul.f32 %v311, 1.442695
        %v313 = vpow.pop %v312
        %v314 = vsub.f32 %v303, %v310
        %v315 = vmul.f32 %v314, 1.442695
        %v316 = vpow.pop %v315
        %v317 = vsub.f32 %v305, %v310
        %v318 = vmul.f32 %v317, 1.442695
        %v319 = vpow.pop %v318
        %v320 = vsub.f32 %v307, %v310
        %v321 = vmul.f32 %v320, 1.442695
        %v322 = vpow.pop %v321
        %v323 = vadd.f32 %v313, %v316
        %v324 = vadd.f32 %v323, %v319
        %v325 = vadd.f32 %v324, %v322
        %v326 = vrcp.pop %v325
        %v327 = vmul.f32 %v313, %v326
        %vm328 = vcmp.eq.s32.totalorder %v300, 0
        %v329 = vsel %vm328, 1, 0
        %v330 = vcvt.s32.f32 %v329
        %v331 = vmul.f32 %v327, %v330
        %v332 = vadd.f32 %v327, %v330
        %v333 = vld [vmem:[%s273] sm:$0x1]
        %vm334 = vcmask 1041408
        %v335 = vsel %vm334, %v331, 0.0
        %v336 = vrot.slane %v335, 4
        %v337 = vadd.f32 %v335, %v336
        %v338 = vrot.slane %v337, 2
        %v339 = vadd.f32 %v337, %v338
        %v340 = vrot.slane %v339, 1
        %v341 = vadd.f32 %v339, %v340
        %v342 = vadd.f32 %v333, %v341
        %343 = vst [vmem:[%s273] sm:$0x1] %v342
        %v344 = vld [vmem:[%s280] sm:$0x1]
        %v345 = vsel %vm334, %v332, 0.0
        %v346 = vrot.slane %v345, 4
        %v347 = vadd.f32 %v345, %v346
        %v348 = vrot.slane %v347, 2
        %v349 = vadd.f32 %v347, %v348
        %v350 = vrot.slane %v349, 1
        %v351 = vadd.f32 %v349, %v350
        %v352 = vadd.f32 %v344, %v351
        %353 = vst [vmem:[%s280] sm:$0x1] %v352
        %v354 = vmul.f32 %v316, %v326
        %vm355 = vcmp.eq.s32.totalorder %v300, 1
        %v356 = vsel %vm355, 1, 0
        %v357 = vcvt.s32.f32 %v356
        %v358 = vmul.f32 %v354, %v357
        %v359 = vadd.f32 %v354, %v357
        %s360 = scalar_lea.vmem %s273, 8 [#allocation7]
        %v361 = vld [vmem:[%s360] sm:$0x1]
        %v362 = vsel %vm334, %v358, 0.0
        %v363 = vrot.slane %v362, 4
        %v364 = vadd.f32 %v362, %v363
        %v365 = vrot.slane %v364, 2
        %v366 = vadd.f32 %v364, %v365
        %v367 = vrot.slane %v366, 1
        %v368 = vadd.f32 %v366, %v367
        %v369 = vadd.f32 %v361, %v368
        %370 = vst [vmem:[%s360] sm:$0x1] %v369
        %s371 = scalar_lea.vmem %s280, 8 [#allocation8]
        %v372 = vld [vmem:[%s371] sm:$0x1]
        %v373 = vsel %vm334, %v359, 0.0
        %v374 = vrot.slane %v373, 4
        %v375 = vadd.f32 %v373, %v374
        %v376 = vrot.slane %v375, 2
        %v377 = vadd.f32 %v375, %v376
        %v378 = vrot.slane %v377, 1
        %v379 = vadd.f32 %v377, %v378
        %v380 = vadd.f32 %v372, %v379
        %381 = vst [vmem:[%s371] sm:$0x1] %v380
        %v382 = vmul.f32 %v319, %v326
        %vm383 = vcmp.eq.s32.totalorder %v300, 2
        %v384 = vsel %vm383, 1, 0
        %v385 = vcvt.s32.f32 %v384
        %v386 = vmul.f32 %v382, %v385
        %v387 = vadd.f32 %v382, %v385
        %s388 = scalar_lea.vmem %s273, 16 [#allocation7]
        %v389 = vld [vmem:[%s388] sm:$0x1]
        %v390 = vsel %vm334, %v386, 0.0
        %v391 = vrot.slane %v390, 4
        %v392 = vadd.f32 %v390, %v391
        %v393 = vrot.slane %v392, 2
        %v394 = vadd.f32 %v392, %v393
        %v395 = vrot.slane %v394, 1
        %v396 = vadd.f32 %v394, %v395
        %v397 = vadd.f32 %v389, %v396
        %398 = vst [vmem:[%s388] sm:$0x1] %v397
        %s399 = scalar_lea.vmem %s280, 16 [#allocation8]
        %v400 = vld [vmem:[%s399] sm:$0x1]
        %v401 = vsel %vm334, %v387, 0.0
        %v402 = vrot.slane %v401, 4
        %v403 = vadd.f32 %v401, %v402
        %v404 = vrot.slane %v403, 2
        %v405 = vadd.f32 %v403, %v404
        %v406 = vrot.slane %v405, 1
        %v407 = vadd.f32 %v405, %v406
        %v408 = vadd.f32 %v400, %v407
        %409 = vst [vmem:[%s399] sm:$0x1] %v408
        %v410 = vmul.f32 %v322, %v326
        %vm411 = vcmp.eq.s32.totalorder %v300, 3
        %v412 = vsel %vm411, 1, 0
        %v413 = vcvt.s32.f32 %v412
        %v414 = vmul.f32 %v410, %v413
        %v415 = vadd.f32 %v410, %v413
        %s416 = scalar_lea.vmem %s273, 24 [#allocation7]
        %v417 = vld [vmem:[%s416] sm:$0x1]
        %v418 = vsel %vm334, %v414, 0.0
        %v419 = vrot.slane %v418, 4
        %v420 = vadd.f32 %v418, %v419
        %v421 = vrot.slane %v420, 2
        %v422 = vadd.f32 %v420, %v421
        %v423 = vrot.slane %v422, 1
        %v424 = vadd.f32 %v422, %v423
        %v425 = vadd.f32 %v417, %v424
        %426 = vst [vmem:[%s416] sm:$0x1] %v425
        %s427 = scalar_lea.vmem %s280, 24 [#allocation8]
        %v428 = vld [vmem:[%s427] sm:$0x1]
        %v429 = vsel %vm334, %v415, 0.0
        %v430 = vrot.slane %v429, 4
        %v431 = vadd.f32 %v429, %v430
        %v432 = vrot.slane %v431, 2
        %v433 = vadd.f32 %v431, %v432
        %v434 = vrot.slane %v433, 1
        %v435 = vadd.f32 %v433, %v434
        %v436 = vadd.f32 %v428, %v435
        %437 = vst [vmem:[%s427] sm:$0x1] %v436
        %s438 = sand.u32 %s124, 1
        %s439 = scalar_lea.sflag [#allocation4], %s438
        %s440 = sand.u32 %s124, 1
        %s441 = smul.addr %s440, 32
        %s442 = scalar_lea.vmem [#allocation7], %s441
        %s443 = sand.u32 %s152, 1
        %s444 = scalar_lea.sflag [#allocation9], %s443
        %s445 = sand.u32 %s152, 1
        %s446 = smul.addr %s445, 32
        %s447 = scalar_lea.vmem [#allocation8], %s446
        // Predicated region
        $region41: #{tpu_custom_call.1} parent=27 // pred_check
          %p448 = pneg %p134
        $region42: #{tpu_custom_call.1} parent=27 // pred_check_branch
          %450 = sbr.rel (%p448) target = $region44
        $region43: #{tpu_custom_call.1} parent=27 // pred_region
          %s452 = ssub.s32 512, 512
          %453 = vsyncadd %s439, %s452
          %s454 = smul.addr %s33, 4
          %s455 = smul.addr %s32, 4
          %s456 = sadd.s32 %s454, %s455
          %s457 = smul.addr %s456, 128
          %s458 = scalar_lea.hbm %s2, %s457
          %s459 = sshll.u32 %s442, 4
          %s460 = int_to_ptr.vmem [resolvable:$true] %s459
          %465 = dma.vmem_to_hbm [thread:$0]  %s460, 512, %s458, %s439, 128, 128, 8
        $region44: #{tpu_custom_call.1} parent=27 // pred_fallthru
          _
        // Predicated region
        $region45: #{tpu_custom_call.1} parent=27 // pred_check
          %p466 = pneg %p162
        $region46: #{tpu_custom_call.1} parent=27 // pred_check_branch
          %468 = sbr.rel (%p466) target = $region48
        $region47: #{tpu_custom_call.1} parent=27 // pred_region
          %s470 = ssub.s32 512, 512
          %471 = vsyncadd %s444, %s470
          %s472 = smul.addr %s33, 4
          %s473 = smul.addr %s32, 4
          %s474 = sadd.s32 %s472, %s473
          %s475 = smul.addr %s474, 128
          %s476 = scalar_lea.hbm %s3, %s475
          %s477 = sshll.u32 %s447, 4
          %s478 = int_to_ptr.vmem [resolvable:$true] %s477
          %483 = dma.vmem_to_hbm [thread:$0]  %s478, 512, %s476, %s444, 128, 128, 8
        $region48: #{tpu_custom_call.1} parent=27 // pred_fallthru
          _
      $region28: #{tpu_custom_call.1} parent=5 // pred_fallthru
        _
      %p484 = scmp.le.s32.totalorder 2, %s22
      // Predicated region
      $region49: #{tpu_custom_call.1} parent=5 // pred_check
        %p485 = pneg %p484
      $region50: #{tpu_custom_call.1} parent=5 // pred_check_branch
        %487 = sbr.rel (%p485) target = $region52
      $region51: #{tpu_custom_call.1} parent=5 // pred_region
        %s488 = ssub.s32 %s22, 2
        // Predicated region
        $region53: #{tpu_custom_call.1} parent=51 // pred_check
          %p489 = pneg %p140
        $region54: #{tpu_custom_call.1} parent=51 // pred_check_branch
          %491 = sbr.rel (%p489) target = $region56
        $region55: #{tpu_custom_call.1} parent=51 // pred_region
          %s492 = sand.u32 %s125, 1
          %s493 = scalar_lea.sflag [#allocation4], %s492
          %s494 = sand.u32 %s125, 1
          %s495 = smul.addr %s494, 32
          %s496 = scalar_lea.vmem [#allocation7], %s495
          %497 = dma.done %s493, 512
        $region56: #{tpu_custom_call.1} parent=51 // pred_fallthru
          _
        // Predicated region
        $region57: #{tpu_custom_call.1} parent=51 // pred_check
          %p498 = pneg %p168
        $region58: #{tpu_custom_call.1} parent=51 // pred_check_branch
          %500 = sbr.rel (%p498) target = $region60
        $region59: #{tpu_custom_call.1} parent=51 // pred_region
          %s501 = sand.u32 %s153, 1
          %s502 = scalar_lea.sflag [#allocation9], %s501
          %s503 = sand.u32 %s153, 1
          %s504 = smul.addr %s503, 32
          %s505 = scalar_lea.vmem [#allocation8], %s504
          %506 = dma.done %s502, 512
        $region60: #{tpu_custom_call.1} parent=51 // pred_fallthru
          _
      $region52: #{tpu_custom_call.1} parent=5 // pred_fallthru
        _
    $region6: #{tpu_custom_call.1} parent=1 // loop_footer
      %s26 = sadd.s32 1, %s22
    $region7: #{tpu_custom_call.1} parent=1 // loop_footer_branch
      %21 = sbr.rel target = $region3
    $region8: #{tpu_custom_call.1} parent=1 // loop_exit
      _
    %507 = vsyncpa [#allocation3], 1
    %s508 = scalar_lea.sflag [#allocation3], 1
    %509 = vsyncpa %s508, 1
    %510 = vsyncpa [#allocation6], 1
    %s511 = scalar_lea.sflag [#allocation6], 1
    %512 = vsyncpa %s511, 1
    %513 = vsyncpa [#allocation4], 1
    %s514 = scalar_lea.sflag [#allocation4], 1
    %515 = vsyncpa %s514, 1
    %516 = vsyncpa [#allocation9], 1
    %s517 = scalar_lea.sflag [#allocation9], 1
    %518 = vsyncpa %s517, 1

</llo_original>
